<compile_context>
chip_gen: v7x
topology: tpu7x:2x2x1
jax: 0.10.0
libtpu: 0.0.40
codegen_flags: <defaults>
</compile_context>

<pallas_src>
import functools

import jax
import jax.numpy as jnp
import numpy as np
from jax import lax
from jax.experimental import pallas as pl
from jax.experimental.pallas import tpu as pltpu

_EPS = 1e-5  # PyTorch nn.LayerNorm default eps


def _round_up(x: int, m: int) -> int:
    return ((x + m - 1) // m) * m


def _fusion_kernel(feats_ref, gw_ref, gb_ref,
                   w1_ref, b1_ref, g1_ref, bt1_ref,
                   w2_ref, b2_ref, out_ref):
    """One row-tile of the full MultiScaleFusion forward.

    feats_ref : [ns, tm, D]   stacked multi-scale features (this row tile)
    gw_ref    : [ns, 1, D]    softmax(scale_weight)[i] * scale_norm[i].gamma
    gb_ref    : [ns, 1, D]    softmax(scale_weight)[i] * scale_norm[i].beta
    w1_ref    : [D, 2D]       fusion Linear1 weight (pre-transposed to [in,out])
    b1_ref    : [1, 2D]
    g1_ref    : [1, 2D]       fusion LayerNorm gamma
    bt1_ref   : [1, 2D]       fusion LayerNorm beta
    w2_ref    : [2D, D]       fusion Linear2 weight (pre-transposed)
    b2_ref    : [1, D]
    out_ref   : [tm, D]
    """
    # ---- per-scale LayerNorm + weighted sum (all scales vectorized) ----
    x = feats_ref[...].astype(jnp.float32)                       # [ns, tm, D]
    mu = jnp.mean(x, axis=-1, keepdims=True)                     # [ns, tm, 1]
    var = jnp.mean(jnp.square(x - mu), axis=-1, keepdims=True)
    xn = (x - mu) * lax.rsqrt(var + _EPS)
    # softmax(scale_weights) already folded into gw/gb in the wrapper.
    fused = jnp.sum(xn * gw_ref[...] + gb_ref[...], axis=0)      # [tm, D]

    # ---- fusion_layer: Linear(D,2D) -> LayerNorm(2D) -> ReLU -> Linear(2D,D)
    h = jnp.dot(fused, w1_ref[...], preferred_element_type=jnp.float32)
    h = h + b1_ref[...]                                          # [tm, 2D]

    mu_h = jnp.mean(h, axis=-1, keepdims=True)
    var_h = jnp.mean(jnp.square(h - mu_h), axis=-1, keepdims=True)
    h = (h - mu_h) * lax.rsqrt(var_h + _EPS)
    h = h * g1_ref[...] + bt1_ref[...]
    h = jnp.maximum(h, 0.0)                                      # ReLU

    y = jnp.dot(h, w2_ref[...], preferred_element_type=jnp.float32)
    y = y + b2_ref[...]                                          # [tm, D]
    out_ref[...] = y.astype(out_ref.dtype)


def multi_scale_fusion(features_list, params, *, block_rows=256, interpret=False):
    """Pallas forward of MultiScaleFusion.

    features_list : list of ns arrays, each [..., D] (all the same shape).
    params        : dict with PyTorch-layout weights:
        scale_weights [ns]
        norm_gamma    [ns, D], norm_beta [ns, D]
        w1 [2D, D], b1 [2D]                 (fusion_layer[0], Linear)
        ln1_gamma [2D], ln1_beta [2D]       (fusion_layer[1], LayerNorm)
        w2 [D, 2D], b2 [D]                  (fusion_layer[3], Linear)
    """
    ns = len(features_list)
    feats = jnp.stack(features_list, axis=0)                     # [ns, ..., D]
    d = feats.shape[-1]
    lead = feats.shape[1:-1]
    m = int(np.prod(lead)) if lead else 1
    feats = feats.reshape(ns, m, d)
    out_dtype = feats.dtype

    # softmax over the ns scale weights, folded into each scale's affine params.
    w = jax.nn.softmax(params["scale_weights"].astype(jnp.float32))
    gw = (w[:, None] * params["norm_gamma"].astype(jnp.float32))[:, None, :]  # [ns,1,D]
    gb = (w[:, None] * params["norm_beta"].astype(jnp.float32))[:, None, :]   # [ns,1,D]

    # Pre-transpose PyTorch [out,in] weights -> [in,out] (one-time XLA transpose).
    w1 = params["w1"].astype(jnp.float32).T                       # [D, 2D]
    b1 = params["b1"].astype(jnp.float32)[None, :]                # [1, 2D]
    g1 = params["ln1_gamma"].astype(jnp.float32)[None, :]         # [1, 2D]
    bt1 = params["ln1_beta"].astype(jnp.float32)[None, :]         # [1, 2D]
    w2 = params["w2"].astype(jnp.float32).T                       # [2D, D]
    b2 = params["b2"].astype(jnp.float32)[None, :]                # [1, D]
    d2 = w1.shape[1]

    # Row tile: multiple of 8 sublanes; pad token count so the grid is exact.
    tm = min(_round_up(block_rows, 8), _round_up(m, 8))
    m_pad = _round_up(m, tm)
    if m_pad != m:
        feats = jnp.pad(feats, ((0, 0), (0, m_pad - m), (0, 0)))

    grid = (m_pad // tm,)
    const2 = lambda i: (0, 0)
    const3 = lambda i: (0, 0, 0)

    out = pl.pallas_call(
        _fusion_kernel,
        out_shape=jax.ShapeDtypeStruct((m_pad, d), out_dtype),
        grid_spec=pltpu.PrefetchScalarGridSpec(
            num_scalar_prefetch=0,
            grid=grid,
            in_specs=[
                pl.BlockSpec((ns, tm, d), lambda i: (0, i, 0)),   # streamed features
                pl.BlockSpec((ns, 1, d), const3),                 # resident params:
                pl.BlockSpec((ns, 1, d), const3),
                pl.BlockSpec((d, d2), const2),
                pl.BlockSpec((1, d2), const2),
                pl.BlockSpec((1, d2), const2),
                pl.BlockSpec((1, d2), const2),
                pl.BlockSpec((d2, d), const2),
                pl.BlockSpec((1, d), const2),
            ],
            out_specs=pl.BlockSpec((tm, d), lambda i: (i, 0)),
        ),
        compiler_params=pltpu.CompilerParams(
            dimension_semantics=("parallel",),
        ),
        interpret=interpret,
    )(feats, gw, gb, w1, b1, g1, bt1, w2, b2)

    out = out[:m]
    return out.reshape(*lead, d) if lead else out.reshape(d)


def _reference(features_list, params):
    """Pure-JAX reference mirroring the PyTorch module."""
    w = jax.nn.softmax(params["scale_weights"].astype(jnp.float32))
    fused = 0.0
    for i, feat in enumerate(features_list):
        x = feat.astype(jnp.float32)
        mu = jnp.mean(x, axis=-1, keepdims=True)
        var = jnp.mean(jnp.square(x - mu), axis=-1, keepdims=True)
        xn = (x - mu) / jnp.sqrt(var + _EPS)
        xn = xn * params["norm_gamma"][i] + params["norm_beta"][i]
        fused = fused + w[i] * xn
    h = fused @ params["w1"].astype(jnp.float32).T + params["b1"]
    mu = jnp.mean(h, axis=-1, keepdims=True)
    var = jnp.mean(jnp.square(h - mu), axis=-1, keepdims=True)
    h = (h - mu) / jnp.sqrt(var + _EPS)
    h = h * params["ln1_gamma"] + params["ln1_beta"]
    h = jnp.maximum(h, 0.0)
    return h @ params["w2"].astype(jnp.float32).T + params["b2"]


if __name__ == "__main__":
    key = jax.random.PRNGKey(0)
    B, S, D, NS = 2, 16, 32, 4
    keys = jax.random.split(key, 13)

    features = [
        jax.random.normal(keys[i], (B, S, D), dtype=jnp.float32) for i in range(NS)
    ]
    params = {
        "scale_weights": jax.random.normal(keys[4], (NS,), dtype=jnp.float32),
        "norm_gamma": 1.0 + 0.1 * jax.random.normal(keys[5], (NS, D), dtype=jnp.float32),
        "norm_beta": 0.1 * jax.random.normal(keys[6], (NS, D), dtype=jnp.float32),
        "w1": 0.1 * jax.random.normal(keys[7], (2 * D, D), dtype=jnp.float32),
        "b1": 0.1 * jax.random.normal(keys[8], (2 * D,), dtype=jnp.float32),
        "ln1_gamma": 1.0 + 0.1 * jax.random.normal(keys[9], (2 * D,), dtype=jnp.float32),
        "ln1_beta": 0.1 * jax.random.normal(keys[10], (2 * D,), dtype=jnp.float32),
        "w2": 0.1 * jax.random.normal(keys[11], (D, 2 * D), dtype=jnp.float32),
        "b2": 0.1 * jax.random.normal(keys[12], (D,), dtype=jnp.float32),
    }

    out = jax.block_until_ready(multi_scale_fusion(features, params))
    ref = jax.block_until_ready(_reference(features, params))
    np.testing.assert_allclose(np.asarray(out), np.asarray(ref), rtol=2e-4, atol=2e-4)
    print("KERNEL_OK")
</pallas_src>

<mosaic_0001>
module attributes {stable_mosaic.version = 11 : i64} {
  func.func @_fusion_kernel(%arg0: i32, %arg1: memref<4x32x32xf32, #tpu.memory_space<vmem>>, %arg2: memref<4x1x32xf32, #tpu.memory_space<vmem>>, %arg3: memref<4x1x32xf32, #tpu.memory_space<vmem>>, %arg4: memref<32x64xf32, #tpu.memory_space<vmem>>, %arg5: memref<1x64xf32, #tpu.memory_space<vmem>>, %arg6: memref<1x64xf32, #tpu.memory_space<vmem>>, %arg7: memref<1x64xf32, #tpu.memory_space<vmem>>, %arg8: memref<64x32xf32, #tpu.memory_space<vmem>>, %arg9: memref<1x32xf32, #tpu.memory_space<vmem>>, %arg10: memref<32x32xf32, #tpu.memory_space<vmem>>) attributes {dimension_semantics = [#tpu.dimension_semantics<parallel>], iteration_bounds = array<i64: 1>, scalar_prefetch = 0 : i64, scratch_operands = 0 : i64, tpu.core_type = #tpu.core_type<tc>, window_params = [{transform_indices = @transform_0, window_bounds = array<i64: 4, 32, 32>}, {pipeline_mode = #tpu.pipeline_mode<synchronous>, transform_indices = @transform_1, window_bounds = array<i64: 4, 1, 32>}, {pipeline_mode = #tpu.pipeline_mode<synchronous>, transform_indices = @transform_2, window_bounds = array<i64: 4, 1, 32>}, {pipeline_mode = #tpu.pipeline_mode<synchronous>, transform_indices = @transform_3, window_bounds = array<i64: 32, 64>}, {pipeline_mode = #tpu.pipeline_mode<synchronous>, transform_indices = @transform_4, window_bounds = array<i64: 1, 64>}, {pipeline_mode = #tpu.pipeline_mode<synchronous>, transform_indices = @transform_5, window_bounds = array<i64: 1, 64>}, {pipeline_mode = #tpu.pipeline_mode<synchronous>, transform_indices = @transform_6, window_bounds = array<i64: 1, 64>}, {pipeline_mode = #tpu.pipeline_mode<synchronous>, transform_indices = @transform_7, window_bounds = array<i64: 64, 32>}, {pipeline_mode = #tpu.pipeline_mode<synchronous>, transform_indices = @transform_8, window_bounds = array<i64: 1, 32>}, {transform_indices = @transform_9, window_bounds = array<i64: 32, 32>}]} {
    %c0 = arith.constant 0 : index
    %c0_0 = arith.constant 0 : index
    %c0_1 = arith.constant 0 : index
    %0 = vector.load %arg1[%c0, %c0_0, %c0_1] : memref<4x32x32xf32, #tpu.memory_space<vmem>>, vector<4x32x32xf32>
    %cst = arith.constant dense<0.000000e+00> : vector<4x32xf32>
    %1 = vector.multi_reduction <add>, %0, %cst [2] : vector<4x32x32xf32> to vector<4x32xf32>
    %2 = vector.shape_cast %1 : vector<4x32xf32> to vector<4x32x1xf32>
    %cst_2 = arith.constant 3.200000e+01 : f32
    %3 = vector.broadcast %cst_2 : f32 to vector<4x32x1xf32>
    %4 = arith.divf %2, %3 : vector<4x32x1xf32>
    %5 = vector.broadcast %4 : vector<4x32x1xf32> to vector<4x32x32xf32>
    %6 = arith.subf %0, %5 : vector<4x32x32xf32>
    %7 = arith.mulf %6, %6 : vector<4x32x32xf32>
    %cst_3 = arith.constant dense<0.000000e+00> : vector<4x32xf32>
    %8 = vector.multi_reduction <add>, %7, %cst_3 [2] : vector<4x32x32xf32> to vector<4x32xf32>
    %9 = vector.shape_cast %8 : vector<4x32xf32> to vector<4x32x1xf32>
    %cst_4 = arith.constant 3.200000e+01 : f32
    %10 = vector.broadcast %cst_4 : f32 to vector<4x32x1xf32>
    %11 = arith.divf %9, %10 : vector<4x32x1xf32>
    %12 = vector.broadcast %4 : vector<4x32x1xf32> to vector<4x32x32xf32>
    %13 = arith.subf %0, %12 : vector<4x32x32xf32>
    %cst_5 = arith.constant 9.99999974E-6 : f32
    %14 = vector.broadcast %cst_5 : f32 to vector<4x32x1xf32>
    %15 = arith.addf %11, %14 : vector<4x32x1xf32>
    %16 = math.rsqrt %15 : vector<4x32x1xf32>
    %17 = vector.broadcast %16 : vector<4x32x1xf32> to vector<4x32x32xf32>
    %18 = arith.mulf %13, %17 : vector<4x32x32xf32>
    %c0_6 = arith.constant 0 : index
    %c0_7 = arith.constant 0 : index
    %c0_8 = arith.constant 0 : index
    %19 = vector.load %arg2[%c0_6, %c0_7, %c0_8] : memref<4x1x32xf32, #tpu.memory_space<vmem>>, vector<4x1x32xf32>
    %20 = vector.broadcast %19 : vector<4x1x32xf32> to vector<4x32x32xf32>
    %21 = arith.mulf %18, %20 : vector<4x32x32xf32>
    %c0_9 = arith.constant 0 : index
    %c0_10 = arith.constant 0 : index
    %c0_11 = arith.constant 0 : index
    %22 = vector.load %arg3[%c0_9, %c0_10, %c0_11] : memref<4x1x32xf32, #tpu.memory_space<vmem>>, vector<4x1x32xf32>
    %23 = vector.broadcast %22 : vector<4x1x32xf32> to vector<4x32x32xf32>
    %24 = arith.addf %21, %23 : vector<4x32x32xf32>
    %cst_12 = arith.constant dense<0.000000e+00> : vector<32x32xf32>
    %25 = vector.multi_reduction <add>, %24, %cst_12 [0] : vector<4x32x32xf32> to vector<32x32xf32>
    %c0_13 = arith.constant 0 : index
    %c0_14 = arith.constant 0 : index
    %26 = vector.load %arg4[%c0_13, %c0_14] : memref<32x64xf32, #tpu.memory_space<vmem>>, vector<32x64xf32>
    %cst_15 = arith.constant dense<0.000000e+00> : vector<32x64xf32>
    %27 = tpu.matmul %25, %26, %cst_15 {dimension_numbers = #tpu.dot_dimension_numbers<[1], [0], [0], [1], [0, 0, 1, 1], [], []>} : vector<32x32xf32>, vector<32x64xf32>, vector<32x64xf32> -> vector<32x64xf32>
    %c0_16 = arith.constant 0 : index
    %c0_17 = arith.constant 0 : index
    %28 = vector.load %arg5[%c0_16, %c0_17] : memref<1x64xf32, #tpu.memory_space<vmem>>, vector<1x64xf32>
    %29 = vector.broadcast %28 : vector<1x64xf32> to vector<32x64xf32>
    %30 = arith.addf %27, %29 : vector<32x64xf32>
    %cst_18 = arith.constant dense<0.000000e+00> : vector<32xf32>
    %31 = vector.multi_reduction <add>, %30, %cst_18 [1] : vector<32x64xf32> to vector<32xf32>
    %32 = vector.shape_cast %31 : vector<32xf32> to vector<32x1xf32>
    %cst_19 = arith.constant 6.400000e+01 : f32
    %33 = vector.broadcast %cst_19 : f32 to vector<32x1xf32>
    %34 = arith.divf %32, %33 : vector<32x1xf32>
    %35 = vector.broadcast %34 : vector<32x1xf32> to vector<32x64xf32>
    %36 = arith.subf %30, %35 : vector<32x64xf32>
    %37 = arith.mulf %36, %36 : vector<32x64xf32>
    %cst_20 = arith.constant dense<0.000000e+00> : vector<32xf32>
    %38 = vector.multi_reduction <add>, %37, %cst_20 [1] : vector<32x64xf32> to vector<32xf32>
    %39 = vector.shape_cast %38 : vector<32xf32> to vector<32x1xf32>
    %cst_21 = arith.constant 6.400000e+01 : f32
    %40 = vector.broadcast %cst_21 : f32 to vector<32x1xf32>
    %41 = arith.divf %39, %40 : vector<32x1xf32>
    %42 = vector.broadcast %34 : vector<32x1xf32> to vector<32x64xf32>
    %43 = arith.subf %30, %42 : vector<32x64xf32>
    %cst_22 = arith.constant 9.99999974E-6 : f32
    %44 = vector.broadcast %cst_22 : f32 to vector<32x1xf32>
    %45 = arith.addf %41, %44 : vector<32x1xf32>
    %46 = math.rsqrt %45 : vector<32x1xf32>
    %47 = vector.broadcast %46 : vector<32x1xf32> to vector<32x64xf32>
    %48 = arith.mulf %43, %47 : vector<32x64xf32>
    %c0_23 = arith.constant 0 : index
    %c0_24 = arith.constant 0 : index
    %49 = vector.load %arg6[%c0_23, %c0_24] : memref<1x64xf32, #tpu.memory_space<vmem>>, vector<1x64xf32>
    %50 = vector.broadcast %49 : vector<1x64xf32> to vector<32x64xf32>
    %51 = arith.mulf %48, %50 : vector<32x64xf32>
    %c0_25 = arith.constant 0 : index
    %c0_26 = arith.constant 0 : index
    %52 = vector.load %arg7[%c0_25, %c0_26] : memref<1x64xf32, #tpu.memory_space<vmem>>, vector<1x64xf32>
    %53 = vector.broadcast %52 : vector<1x64xf32> to vector<32x64xf32>
    %54 = arith.addf %51, %53 : vector<32x64xf32>
    %cst_27 = arith.constant 0.000000e+00 : f32
    %55 = vector.broadcast %cst_27 : f32 to vector<32x64xf32>
    %56 = arith.maximumf %54, %55 : vector<32x64xf32>
    %c0_28 = arith.constant 0 : index
    %c0_29 = arith.constant 0 : index
    %57 = vector.load %arg8[%c0_28, %c0_29] : memref<64x32xf32, #tpu.memory_space<vmem>>, vector<64x32xf32>
    %cst_30 = arith.constant dense<0.000000e+00> : vector<32x32xf32>
    %58 = tpu.matmul %56, %57, %cst_30 {dimension_numbers = #tpu.dot_dimension_numbers<[1], [0], [0], [1], [0, 0, 1, 1], [], []>} : vector<32x64xf32>, vector<64x32xf32>, vector<32x32xf32> -> vector<32x32xf32>
    %c0_31 = arith.constant 0 : index
    %c0_32 = arith.constant 0 : index
    %59 = vector.load %arg9[%c0_31, %c0_32] : memref<1x32xf32, #tpu.memory_space<vmem>>, vector<1x32xf32>
    %60 = vector.broadcast %59 : vector<1x32xf32> to vector<32x32xf32>
    %61 = arith.addf %58, %60 : vector<32x32xf32>
    %c0_33 = arith.constant 0 : index
    %c0_34 = arith.constant 0 : index
    %62 = vector.load %arg10[%c0_33, %c0_34] : memref<32x32xf32, #tpu.memory_space<vmem>>, vector<32x32xf32>
    tpu.vector_store %arg10[%c0_33, %c0_34], %61 {strides = array<i32>} : memref<32x32xf32, #tpu.memory_space<vmem>>, vector<32x32xf32>,
    return
  }
  func.func @transform_0(%arg0: i32) -> (i32, i32, i32) {
    %c0_i32 = arith.constant 0 : i32
    %c0_i32_0 = arith.constant 0 : i32
    %c0_i32_1 = arith.constant 0 : i32
    return %c0_i32, %arg0, %c0_i32_0 : i32, i32, i32
  }
  func.func @transform_1(%arg0: i32) -> (i32, i32, i32) {
    %c0_i32 = arith.constant 0 : i32
    %c0_i32_0 = arith.constant 0 : i32
    %c0_i32_1 = arith.constant 0 : i32
    %c0_i32_2 = arith.constant 0 : i32
    return %c0_i32, %c0_i32_0, %c0_i32_1 : i32, i32, i32
  }
  func.func @transform_2(%arg0: i32) -> (i32, i32, i32) {
    %c0_i32 = arith.constant 0 : i32
    %c0_i32_0 = arith.constant 0 : i32
    %c0_i32_1 = arith.constant 0 : i32
    %c0_i32_2 = arith.constant 0 : i32
    return %c0_i32, %c0_i32_0, %c0_i32_1 : i32, i32, i32
  }
  func.func @transform_3(%arg0: i32) -> (i32, i32) {
    %c0_i32 = arith.constant 0 : i32
    %c0_i32_0 = arith.constant 0 : i32
    %c0_i32_1 = arith.constant 0 : i32
    return %c0_i32, %c0_i32_0 : i32, i32
  }
  func.func @transform_4(%arg0: i32) -> (i32, i32) {
    %c0_i32 = arith.constant 0 : i32
    %c0_i32_0 = arith.constant 0 : i32
    %c0_i32_1 = arith.constant 0 : i32
    return %c0_i32, %c0_i32_0 : i32, i32
  }
  func.func @transform_5(%arg0: i32) -> (i32, i32) {
    %c0_i32 = arith.constant 0 : i32
    %c0_i32_0 = arith.constant 0 : i32
    %c0_i32_1 = arith.constant 0 : i32
    return %c0_i32, %c0_i32_0 : i32, i32
  }
  func.func @transform_6(%arg0: i32) -> (i32, i32) {
    %c0_i32 = arith.constant 0 : i32
    %c0_i32_0 = arith.constant 0 : i32
    %c0_i32_1 = arith.constant 0 : i32
    return %c0_i32, %c0_i32_0 : i32, i32
  }
  func.func @transform_7(%arg0: i32) -> (i32, i32) {
    %c0_i32 = arith.constant 0 : i32
    %c0_i32_0 = arith.constant 0 : i32
    %c0_i32_1 = arith.constant 0 : i32
    return %c0_i32, %c0_i32_0 : i32, i32
  }
  func.func @transform_8(%arg0: i32) -> (i32, i32) {
    %c0_i32 = arith.constant 0 : i32
    %c0_i32_0 = arith.constant 0 : i32
    %c0_i32_1 = arith.constant 0 : i32
    return %c0_i32, %c0_i32_0 : i32, i32
  }
  func.func @transform_9(%arg0: i32) -> (i32, i32) {
    %c0_i32 = arith.constant 0 : i32
    %c0_i32_0 = arith.constant 0 : i32
    return %arg0, %c0_i32 : i32, i32
  }
}

</mosaic_0001>

<llo_original>
// kernel: tpu_custom_call.1
$region0: #{tpu_custom_call.1}
  #allocation0 [shape = 'u32[]', space=smem, size = 0x4, offset = 0x4, fixed_abs, tag = 'smem constant byte address 0x4 - core index']
  #allocation1 [shape = 'u32[144,128]{1,0:T(1,128)}', space=vmem, size = 0x12000, scoped, tag = 'internal scratch']
  %s0 = inlined_call_operand.hbm [shape: f32[4,32,32], index: 0, kind: input, shape index: {}]
  %s1 = inlined_call_operand.vmem [shape: f32[4,1,32], index: 1, kind: input, shape index: {}]
  %s2 = inlined_call_operand.vmem [shape: f32[4,1,32], index: 2, kind: input, shape index: {}]
  %s3 = inlined_call_operand.vmem [shape: f32[32,64], index: 3, kind: input, shape index: {}]
  %s4 = inlined_call_operand.vmem [shape: f32[1,64], index: 4, kind: input, shape index: {}]
  %s5 = inlined_call_operand.vmem [shape: f32[1,64], index: 5, kind: input, shape index: {}]
  %s6 = inlined_call_operand.vmem [shape: f32[1,64], index: 6, kind: input, shape index: {}]
  %s7 = inlined_call_operand.vmem [shape: f32[64,32], index: 7, kind: input, shape index: {}]
  %s8 = inlined_call_operand.vmem [shape: f32[1,32], index: 8, kind: input, shape index: {}]
  %s9 = inlined_call_operand.hbm [shape: f32[32,32], index: 9, kind: output, shape index: {}]
  %s10 = sld [smem:[#allocation0]]
  $region50: #{tpu_custom_call.1} parent=0
    _
  %s12 = ssub.s32 1, %s10
  %s13 = scalar_select 0, %s12, %s10
  $region1: #{tpu_custom_call.1} parent=0
    #allocation2 [shape = 'u8[65536]{0}', space=vmem, size = 0x10000, scoped, tag = 'input window, operand 0, single buffered']
    #allocation3 [shape = 's32[1]{0}', space=sflag, size = 0x4, scoped, tag = 'scoped memory for tpu_custom_call.1']
    #allocation4 [shape = 's32[1]{0}', space=sflag, size = 0x4, scoped, tag = 'scoped memory for tpu_custom_call.1']
    #allocation5 [shape = 'u8[16384]{0}', space=vmem, size = 0x4000, scoped, tag = 'output window, operand 0, single buffered']
    %14 = vsyncpa [#allocation3], 0
    %15 = vsyncpa [#allocation4], 0
    // Predicated region
    $region2: #{tpu_custom_call.1} parent=1 // pred_check
      _
    $region3: #{tpu_custom_call.1} parent=1 // pred_check_branch
      %17 = sbr.rel (0) target = $region5
    $region4: #{tpu_custom_call.1} parent=1 // pred_region
      %s19 = ssub.s32 2048, 2048
      %20 = vsyncadd [#allocation3], %s19
      %s21 = sshll.u32 [#allocation2], 4
      %s22 = int_to_ptr.vmem [resolvable:$true] %s21
      %27 = dma.hbm_to_vmem [thread:$0]  %s0, 2048, %s22, [#allocation3], 128, 128, 8
    $region5: #{tpu_custom_call.1} parent=1 // pred_fallthru
      _
    // Predicated region
    $region6: #{tpu_custom_call.1} parent=1 // pred_check
      _
    $region7: #{tpu_custom_call.1} parent=1 // pred_check_branch
      %29 = sbr.rel (0) target = $region9
    $region8: #{tpu_custom_call.1} parent=1 // pred_region
      _
    $region9: #{tpu_custom_call.1} parent=1 // pred_fallthru
      _
    // Predicated region
    $region10: #{tpu_custom_call.1} parent=1 // pred_check
      _
    $region11: #{tpu_custom_call.1} parent=1 // pred_check_branch
      %31 = sbr.rel (0) target = $region13
    $region12: #{tpu_custom_call.1} parent=1 // pred_region
      _
    $region13: #{tpu_custom_call.1} parent=1 // pred_fallthru
      _
    // Predicated region
    $region14: #{tpu_custom_call.1} parent=1 // pred_check
      _
    $region15: #{tpu_custom_call.1} parent=1 // pred_check_branch
      %33 = sbr.rel (0) target = $region17
    $region16: #{tpu_custom_call.1} parent=1 // pred_region
      _
    $region17: #{tpu_custom_call.1} parent=1 // pred_fallthru
      _
    // Predicated region
    $region18: #{tpu_custom_call.1} parent=1 // pred_check
      _
    $region19: #{tpu_custom_call.1} parent=1 // pred_check_branch
      %35 = sbr.rel (0) target = $region21
    $region20: #{tpu_custom_call.1} parent=1 // pred_region
      _
    $region21: #{tpu_custom_call.1} parent=1 // pred_fallthru
      _
    // Predicated region
    $region22: #{tpu_custom_call.1} parent=1 // pred_check
      _
    $region23: #{tpu_custom_call.1} parent=1 // pred_check_branch
      %37 = sbr.rel (0) target = $region25
    $region24: #{tpu_custom_call.1} parent=1 // pred_region
      _
    $region25: #{tpu_custom_call.1} parent=1 // pred_fallthru
      _
    // Predicated region
    $region26: #{tpu_custom_call.1} parent=1 // pred_check
      _
    $region27: #{tpu_custom_call.1} parent=1 // pred_check_branch
      %39 = sbr.rel (0) target = $region29
    $region28: #{tpu_custom_call.1} parent=1 // pred_region
      _
    $region29: #{tpu_custom_call.1} parent=1 // pred_fallthru
      _
    // Predicated region
    $region30: #{tpu_custom_call.1} parent=1 // pred_check
      _
    $region31: #{tpu_custom_call.1} parent=1 // pred_check_branch
      %41 = sbr.rel (0) target = $region33
    $region32: #{tpu_custom_call.1} parent=1 // pred_region
      _
    $region33: #{tpu_custom_call.1} parent=1 // pred_fallthru
      _
    // Predicated region
    $region34: #{tpu_custom_call.1} parent=1 // pred_check
      _
    $region35: #{tpu_custom_call.1} parent=1 // pred_check_branch
      %43 = sbr.rel (0) target = $region37
    $region36: #{tpu_custom_call.1} parent=1 // pred_region
      _
    $region37: #{tpu_custom_call.1} parent=1 // pred_fallthru
      _
    // Predicated region
    $region38: #{tpu_custom_call.1} parent=1 // pred_check
      _
    $region39: #{tpu_custom_call.1} parent=1 // pred_check_branch
      %45 = sbr.rel (0) target = $region41
    $region40: #{tpu_custom_call.1} parent=1 // pred_region
      %46 = dma.done [#allocation3], 2048
    $region41: #{tpu_custom_call.1} parent=1 // pred_fallthru
      _
    %v47 = vld [vmem:[#allocation2] sm:$0xff]
    %v48 = vld [vmem:[#allocation2 + $0x8] sm:$0xff]
    %v49 = vld [vmem:[#allocation2 + $0x10] sm:$0xff]
    %v50 = vld [vmem:[#allocation2 + $0x18] sm:$0xff]
    %v51 = vld [vmem:[#allocation2 + $0x20] sm:$0xff]
    %v52 = vld [vmem:[#allocation2 + $0x28] sm:$0xff]
    %v53 = vld [vmem:[#allocation2 + $0x30] sm:$0xff]
    %v54 = vld [vmem:[#allocation2 + $0x38] sm:$0xff]
    %v55 = vld [vmem:[#allocation2 + $0x40] sm:$0xff]
    %v56 = vld [vmem:[#allocation2 + $0x48] sm:$0xff]
    %v57 = vld [vmem:[#allocation2 + $0x50] sm:$0xff]
    %v58 = vld [vmem:[#allocation2 + $0x58] sm:$0xff]
    %v59 = vld [vmem:[#allocation2 + $0x60] sm:$0xff]
    %v60 = vld [vmem:[#allocation2 + $0x68] sm:$0xff]
    %v61 = vld [vmem:[#allocation2 + $0x70] sm:$0xff]
    %v62 = vld [vmem:[#allocation2 + $0x78] sm:$0xff]
    %vm63 = vcmask 261120
    %v64 = vsel %vm63, %v47, 0.0
    %65 = vadd.xlane.f32.xlu0 %v64
    %v66 = vpop.xlane.xlu0 %65
    %v67 = vsel %vm63, %v48, 0.0
    %68 = vadd.xlane.f32.xlu0 %v67
    %v69 = vpop.xlane.xlu0 %68
    %v70 = vsel %vm63, %v49, 0.0
    %71 = vadd.xlane.f32.xlu0 %v70
    %v72 = vpop.xlane.xlu0 %71
    %v73 = vsel %vm63, %v50, 0.0
    %74 = vadd.xlane.f32.xlu0 %v73
    %v75 = vpop.xlane.xlu0 %74
    %v76 = vsel %vm63, %v51, 0.0
    %77 = vadd.xlane.f32.xlu0 %v76
    %v78 = vpop.xlane.xlu0 %77
    %v79 = vsel %vm63, %v52, 0.0
    %80 = vadd.xlane.f32.xlu0 %v79
    %v81 = vpop.xlane.xlu0 %80
    %v82 = vsel %vm63, %v53, 0.0
    %83 = vadd.xlane.f32.xlu0 %v82
    %v84 = vpop.xlane.xlu0 %83
    %v85 = vsel %vm63, %v54, 0.0
    %86 = vadd.xlane.f32.xlu0 %v85
    %v87 = vpop.xlane.xlu0 %86
    %v88 = vsel %vm63, %v55, 0.0
    %89 = vadd.xlane.f32.xlu0 %v88
    %v90 = vpop.xlane.xlu0 %89
    %v91 = vsel %vm63, %v56, 0.0
    %92 = vadd.xlane.f32.xlu0 %v91
    %v93 = vpop.xlane.xlu0 %92
    %v94 = vsel %vm63, %v57, 0.0
    %95 = vadd.xlane.f32.xlu0 %v94
    %v96 = vpop.xlane.xlu0 %95
    %v97 = vsel %vm63, %v58, 0.0
    %98 = vadd.xlane.f32.xlu0 %v97
    %v99 = vpop.xlane.xlu0 %98
    %v100 = vsel %vm63, %v59, 0.0
    %101 = vadd.xlane.f32.xlu0 %v100
    %v102 = vpop.xlane.xlu0 %101
    %v103 = vsel %vm63, %v60, 0.0
    %104 = vadd.xlane.f32.xlu0 %v103
    %v105 = vpop.xlane.xlu0 %104
    %v106 = vsel %vm63, %v61, 0.0
    %107 = vadd.xlane.f32.xlu0 %v106
    %v108 = vpop.xlane.xlu0 %107
    %v109 = vsel %vm63, %v62, 0.0
    %110 = vadd.xlane.f32.xlu0 %v109
    %v111 = vpop.xlane.xlu0 %110
    %v112 = vrcp.pop 32.0
    %v113 = vmul.f32 %v66, %v112
    %v114 = vmul.f32 %v69, %v112
    %v115 = vmul.f32 %v72, %v112
    %v116 = vmul.f32 %v75, %v112
    %v117 = vmul.f32 %v78, %v112
    %v118 = vmul.f32 %v81, %v112
    %v119 = vmul.f32 %v84, %v112
    %v120 = vmul.f32 %v87, %v112
    %v121 = vmul.f32 %v90, %v112
    %v122 = vmul.f32 %v93, %v112
    %v123 = vmul.f32 %v96, %v112
    %v124 = vmul.f32 %v99, %v112
    %v125 = vmul.f32 %v102, %v112
    %v126 = vmul.f32 %v105, %v112
    %v127 = vmul.f32 %v108, %v112
    %v128 = vmul.f32 %v111, %v112
    %v129 = vsub.f32 %v47, %v113
    %v130 = vsub.f32 %v48, %v114
    %v131 = vsub.f32 %v49, %v115
    %v132 = vsub.f32 %v50, %v116
    %v133 = vsub.f32 %v51, %v117
    %v134 = vsub.f32 %v52, %v118
    %v135 = vsub.f32 %v53, %v119
    %v136 = vsub.f32 %v54, %v120
    %v137 = vsub.f32 %v55, %v121
    %v138 = vsub.f32 %v56, %v122
    %v139 = vsub.f32 %v57, %v123
    %v140 = vsub.f32 %v58, %v124
    %v141 = vsub.f32 %v59, %v125
    %v142 = vsub.f32 %v60, %v126
    %v143 = vsub.f32 %v61, %v127
    %v144 = vsub.f32 %v62, %v128
    %v145 = vmul.f32 %v129, %v129
    %v146 = vmul.f32 %v130, %v130
    %v147 = vmul.f32 %v131, %v131
    %v148 = vmul.f32 %v132, %v132
    %v149 = vmul.f32 %v133, %v133
    %v150 = vmul.f32 %v134, %v134
    %v151 = vmul.f32 %v135, %v135
    %v152 = vmul.f32 %v136, %v136
    %v153 = vmul.f32 %v137, %v137
    %v154 = vmul.f32 %v138, %v138
    %v155 = vmul.f32 %v139, %v139
    %v156 = vmul.f32 %v140, %v140
    %v157 = vmul.f32 %v141, %v141
    %v158 = vmul.f32 %v142, %v142
    %v159 = vmul.f32 %v143, %v143
    %v160 = vmul.f32 %v144, %v144
    %v161 = vsel %vm63, %v145, 0.0
    %162 = vadd.xlane.f32.xlu0 %v161
    %v163 = vpop.xlane.xlu0 %162
    %v164 = vsel %vm63, %v146, 0.0
    %165 = vadd.xlane.f32.xlu0 %v164
    %v166 = vpop.xlane.xlu0 %165
    %v167 = vsel %vm63, %v147, 0.0
    %168 = vadd.xlane.f32.xlu0 %v167
    %v169 = vpop.xlane.xlu0 %168
    %v170 = vsel %vm63, %v148, 0.0
    %171 = vadd.xlane.f32.xlu0 %v170
    %v172 = vpop.xlane.xlu0 %171
    %v173 = vsel %vm63, %v149, 0.0
    %174 = vadd.xlane.f32.xlu0 %v173
    %v175 = vpop.xlane.xlu0 %174
    %v176 = vsel %vm63, %v150, 0.0
    %177 = vadd.xlane.f32.xlu0 %v176
    %v178 = vpop.xlane.xlu0 %177
    %v179 = vsel %vm63, %v151, 0.0
    %180 = vadd.xlane.f32.xlu0 %v179
    %v181 = vpop.xlane.xlu0 %180
    %v182 = vsel %vm63, %v152, 0.0
    %183 = vadd.xlane.f32.xlu0 %v182
    %v184 = vpop.xlane.xlu0 %183
    %v185 = vsel %vm63, %v153, 0.0
    %186 = vadd.xlane.f32.xlu0 %v185
    %v187 = vpop.xlane.xlu0 %186
    %v188 = vsel %vm63, %v154, 0.0
    %189 = vadd.xlane.f32.xlu0 %v188
    %v190 = vpop.xlane.xlu0 %189
    %v191 = vsel %vm63, %v155, 0.0
    %192 = vadd.xlane.f32.xlu0 %v191
    %v193 = vpop.xlane.xlu0 %192
    %v194 = vsel %vm63, %v156, 0.0
    %195 = vadd.xlane.f32.xlu0 %v194
    %v196 = vpop.xlane.xlu0 %195
    %v197 = vsel %vm63, %v157, 0.0
    %198 = vadd.xlane.f32.xlu0 %v197
    %v199 = vpop.xlane.xlu0 %198
    %v200 = vsel %vm63, %v158, 0.0
    %201 = vadd.xlane.f32.xlu0 %v200
    %v202 = vpop.xlane.xlu0 %201
    %v203 = vsel %vm63, %v159, 0.0
    %204 = vadd.xlane.f32.xlu0 %v203
    %v205 = vpop.xlane.xlu0 %204
    %v206 = vsel %vm63, %v160, 0.0
    %207 = vadd.xlane.f32.xlu0 %v206
    %v208 = vpop.xlane.xlu0 %207
    %v209 = vmul.f32 %v163, %v112
    %v210 = vmul.f32 %v166, %v112
    %v211 = vmul.f32 %v169, %v112
    %v212 = vmul.f32 %v172, %v112
    %v213 = vmul.f32 %v175, %v112
    %v214 = vmul.f32 %v178, %v112
    %v215 = vmul.f32 %v181, %v112
    %v216 = vmul.f32 %v184, %v112
    %v217 = vmul.f32 %v187, %v112
    %v218 = vmul.f32 %v190, %v112
    %v219 = vmul.f32 %v193, %v112
    %v220 = vmul.f32 %v196, %v112
    %v221 = vmul.f32 %v199, %v112
    %v222 = vmul.f32 %v202, %v112
    %v223 = vmul.f32 %v205, %v112
    %v224 = vmul.f32 %v208, %v112
    %v225 = vadd.f32 %v209, 1e-05
    %v226 = vadd.f32 %v210, 1e-05
    %v227 = vadd.f32 %v211, 1e-05
    %v228 = vadd.f32 %v212, 1e-05
    %v229 = vadd.f32 %v213, 1e-05
    %v230 = vadd.f32 %v214, 1e-05
    %v231 = vadd.f32 %v215, 1e-05
    %v232 = vadd.f32 %v216, 1e-05
    %v233 = vadd.f32 %v217, 1e-05
    %v234 = vadd.f32 %v218, 1e-05
    %v235 = vadd.f32 %v219, 1e-05
    %v236 = vadd.f32 %v220, 1e-05
    %v237 = vadd.f32 %v221, 1e-05
    %v238 = vadd.f32 %v222, 1e-05
    %v239 = vadd.f32 %v223, 1e-05
    %v240 = vadd.f32 %v224, 1e-05
    %v241 = vrsqrt.pop %v225
    %v242 = vrsqrt.pop %v226
    %v243 = vrsqrt.pop %v227
    %v244 = vrsqrt.pop %v228
    %v245 = vrsqrt.pop %v229
    %v246 = vrsqrt.pop %v230
    %v247 = vrsqrt.pop %v231
    %v248 = vrsqrt.pop %v232
    %v249 = vrsqrt.pop %v233
    %v250 = vrsqrt.pop %v234
    %v251 = vrsqrt.pop %v235
    %v252 = vrsqrt.pop %v236
    %v253 = vrsqrt.pop %v237
    %v254 = vrsqrt.pop %v238
    %v255 = vrsqrt.pop %v239
    %v256 = vrsqrt.pop %v240
    %v257 = vmul.f32 %v129, %v241
    %v258 = vmul.f32 %v130, %v242
    %v259 = vmul.f32 %v131, %v243
    %v260 = vmul.f32 %v132, %v244
    %v261 = vmul.f32 %v133, %v245
    %v262 = vmul.f32 %v134, %v246
    %v263 = vmul.f32 %v135, %v247
    %v264 = vmul.f32 %v136, %v248
    %v265 = vmul.f32 %v137, %v249
    %v266 = vmul.f32 %v138, %v250
    %v267 = vmul.f32 %v139, %v251
    %v268 = vmul.f32 %v140, %v252
    %v269 = vmul.f32 %v141, %v253
    %v270 = vmul.f32 %v142, %v254
    %v271 = vmul.f32 %v143, %v255
    %v272 = vmul.f32 %v144, %v256
    %v273 = vld [vmem:[%s1] sm:$0x1]
    %v274 = vld [vmem:[%s1 + $0x1] sm:$0x1]
    %v275 = vld [vmem:[%s1 + $0x2] sm:$0x1]
    %v276 = vld [vmem:[%s1 + $0x3] sm:$0x1]
    %v281 = vlaneseq
    %v282 = vshrl.u32 %v281, 7
    %v283 = vsub.s32 0, %v282
    %v284 = vrot.slane %v273, %v283
    %v285 = vlaneseq
    %v286 = vshrl.u32 %v285, 7
    %v287 = vsub.s32 0, %v286
    %v288 = vrot.slane %v274, %v287
    %v289 = vlaneseq
    %v290 = vshrl.u32 %v289, 7
    %v291 = vsub.s32 0, %v290
    %v292 = vrot.slane %v275, %v291
    %v293 = vlaneseq
    %v294 = vshrl.u32 %v293, 7
    %v295 = vsub.s32 0, %v294
    %v296 = vrot.slane %v276, %v295
    %v301 = vmul.f32 %v257, %v284
    %v302 = vmul.f32 %v258, %v284
    %v303 = vmul.f32 %v259, %v284
    %v304 = vmul.f32 %v260, %v284
    %v305 = vmul.f32 %v261, %v288
    %v306 = vmul.f32 %v262, %v288
    %v307 = vmul.f32 %v263, %v288
    %v308 = vmul.f32 %v264, %v288
    %v309 = vmul.f32 %v265, %v292
    %v310 = vmul.f32 %v266, %v292
    %v311 = vmul.f32 %v267, %v292
    %v312 = vmul.f32 %v268, %v292
    %v313 = vmul.f32 %v269, %v296
    %v314 = vmul.f32 %v270, %v296
    %v315 = vmul.f32 %v271, %v296
    %v316 = vmul.f32 %v272, %v296
    %v317 = vld [vmem:[%s2] sm:$0x1]
    %v318 = vld [vmem:[%s2 + $0x1] sm:$0x1]
    %v319 = vld [vmem:[%s2 + $0x2] sm:$0x1]
    %v320 = vld [vmem:[%s2 + $0x3] sm:$0x1]
    %v325 = vlaneseq
    %v326 = vshrl.u32 %v325, 7
    %v327 = vsub.s32 0, %v326
    %v328 = vrot.slane %v317, %v327
    %v329 = vlaneseq
    %v330 = vshrl.u32 %v329, 7
    %v331 = vsub.s32 0, %v330
    %v332 = vrot.slane %v318, %v331
    %v333 = vlaneseq
    %v334 = vshrl.u32 %v333, 7
    %v335 = vsub.s32 0, %v334
    %v336 = vrot.slane %v319, %v335
    %v337 = vlaneseq
    %v338 = vshrl.u32 %v337, 7
    %v339 = vsub.s32 0, %v338
    %v340 = vrot.slane %v320, %v339
    %v345 = vadd.f32 %v301, %v328
    %v346 = vadd.f32 %v302, %v328
    %v347 = vadd.f32 %v303, %v328
    %v348 = vadd.f32 %v304, %v328
    %v349 = vadd.f32 %v305, %v332
    %v350 = vadd.f32 %v306, %v332
    %v351 = vadd.f32 %v307, %v332
    %v352 = vadd.f32 %v308, %v332
    %v353 = vadd.f32 %v309, %v336
    %v354 = vadd.f32 %v310, %v336
    %v355 = vadd.f32 %v311, %v336
    %v356 = vadd.f32 %v312, %v336
    %v357 = vadd.f32 %v313, %v340
    %v358 = vadd.f32 %v314, %v340
    %v359 = vadd.f32 %v315, %v340
    %v360 = vadd.f32 %v316, %v340
    %v361 = vsel %vm63, %v345, 0.0
    %v362 = vsel %vm63, %v349, 0.0
    %v363 = vadd.f32 %v361, %v362
    %v364 = vsel %vm63, %v353, 0.0
    %v365 = vadd.f32 %v363, %v364
    %v366 = vsel %vm63, %v357, 0.0
    %v367 = vadd.f32 %v365, %v366
    %v368 = vsel %vm63, %v346, 0.0
    %v369 = vsel %vm63, %v350, 0.0
    %v370 = vadd.f32 %v368, %v369
    %v371 = vsel %vm63, %v354, 0.0
    %v372 = vadd.f32 %v370, %v371
    %v373 = vsel %vm63, %v358, 0.0
    %v374 = vadd.f32 %v372, %v373
    %v375 = vsel %vm63, %v347, 0.0
    %v376 = vsel %vm63, %v351, 0.0
    %v377 = vadd.f32 %v375, %v376
    %v378 = vsel %vm63, %v355, 0.0
    %v379 = vadd.f32 %v377, %v378
    %v380 = vsel %vm63, %v359, 0.0
    %v381 = vadd.f32 %v379, %v380
    %v382 = vsel %vm63, %v348, 0.0
    %v383 = vsel %vm63, %v352, 0.0
    %v384 = vadd.f32 %v382, %v383
    %v385 = vsel %vm63, %v356, 0.0
    %v386 = vadd.f32 %v384, %v385
    %v387 = vsel %vm63, %v360, 0.0
    %v388 = vadd.f32 %v386, %v387
    %v389 = vld [vmem:[%s3] sm:$0xff]
    %v390 = vld [vmem:[%s3 + $0x8] sm:$0xff]
    %v391 = vld [vmem:[%s3 + $0x10] sm:$0xff]
    %v392 = vld [vmem:[%s3 + $0x18] sm:$0xff]
    %v393 = vld [vmem:[%s4] sm:$0x1]
    %v395 = vlaneseq
    %v396 = vshrl.u32 %v395, 7
    %v397 = vsub.s32 0, %v396
    %v398 = vrot.slane %v393, %v397
    %v401 = vsel %vm63, %v367, 0
    %v404 = vsel %vm63, %v374, 0
    %v407 = vsel %vm63, %v381, 0
    %v410 = vsel %vm63, %v388, 0
    %412 = vmatprep.subr.mxu0 0.0
    %413 = vmatpush1.msra.mxu0 %v389
    %414 = vmatprep.subr.mxu0 0.0
    %415 = vmatpush1.msra.mxu0 %v390
    %416 = vmatprep.subr.mxu0 0.0
    %417 = vmatpush1.msra.mxu0 %v391
    %418 = vmatprep.subr.mxu0 0.0
    %419 = vmatpush1.msra.mxu0 %v392
    %420 = vmatprep.subr.mxu0 0.0
    %421 = vmatpush1.msra.mxu0 0.0
    %422 = vmatprep.subr.mxu0 0.0
    %423 = vmatpush1.msra.mxu0 0.0
    %424 = vmatprep.subr.mxu0 0.0
    %425 = vmatpush1.msra.mxu0 0.0
    %426 = vmatprep.subr.mxu0 0.0
    %427 = vmatpush1.msra.mxu0 0.0
    %428 = vmatprep.subr.mxu0 0.0
    %429 = vmatpush1.msra.mxu0 0.0
    %430 = vmatprep.subr.mxu0 0.0
    %431 = vmatpush1.msra.mxu0 0.0
    %432 = vmatprep.subr.mxu0 0.0
    %433 = vmatpush1.msra.mxu0 0.0
    %434 = vmatprep.subr.mxu0 0.0
    %435 = vmatpush1.msra.mxu0 0.0
    %436 = vmatprep.subr.mxu0 0.0
    %437 = vmatpush1.msra.mxu0 0.0
    %438 = vmatprep.subr.mxu0 0.0
    %439 = vmatpush1.msra.mxu0 0.0
    %440 = vmatprep.subr.mxu0 0.0
    %441 = vmatpush1.msra.mxu0 0.0
    %442 = vmatprep.subr.mxu0 0.0
    %443 = vmatpush1.msra.mxu0 0.0
    %444 = vmatprep.subr.mxu0 0.0
    %445 = vmatpush1.msra.mxu0 0.0
    %446 = vmatprep.subr.mxu0 0.0
    %447 = vmatpush1.msra.mxu0 0.0
    %448 = vmatprep.subr.mxu0 0.0
    %449 = vmatpush1.msra.mxu0 0.0
    %450 = vmatprep.subr.mxu0 0.0
    %451 = vmatpush1.msra.mxu0 0.0
    %452 = vmatprep.subr.mxu0 0.0
    %453 = vmatpush1.msra.mxu0 0.0
    %454 = vmatprep.subr.mxu0 0.0
    %455 = vmatpush1.msra.mxu0 0.0
    %456 = vmatprep.subr.mxu0 0.0
    %457 = vmatpush1.msra.mxu0 0.0
    %458 = vmatprep.subr.mxu0 0.0
    %459 = vmatpush1.msra.mxu0 0.0
    %460 = vmatprep.subr.mxu0 0.0
    %461 = vmatpush1.msra.mxu0 0.0
    %462 = vmatprep.subr.mxu0 0.0
    %463 = vmatpush1.msra.mxu0 0.0
    %464 = vmatprep.subr.mxu0 0.0
    %465 = vmatpush1.msra.mxu0 0.0
    %466 = vmatprep.subr.mxu0 0.0
    %467 = vmatpush1.msra.mxu0 0.0
    %468 = vmatprep.subr.mxu0 0.0
    %469 = vmatpush1.msra.mxu0 0.0
    %470 = vmatprep.subr.mxu0 0.0
    %471 = vmatpush1.msra.mxu0 0.0
    %472 = vmatprep.subr.mxu0 0.0
    %473 = vmatpush1.msra.mxu0 0.0
    %474 = vmatprep.subr.mxu0 0.0
    %475 = vmatpush1.msra.mxu0 0.0
    %476 = vmatprep.mubr.f32.mxu0 0.0
    %477 = vmatmul.mubr.f32.gmra.mrb[0].mxu0 %v401
    %v478 = vpop.f32.mrb[0].mxu0
    %v479 = vadd.f32 %v398, %v478
    %v480 = vpop.f32.mrb[0].mxu0
    %481 = vmatprep.mubr.f32.mxu0 0.0
    %482 = vmatmul.mubr.f32.gmra.mrb[0].mxu0 %v404
    %v483 = vpop.f32.mrb[0].mxu0
    %v484 = vadd.f32 %v398, %v483
    %v485 = vpop.f32.mrb[0].mxu0
    %486 = vmatprep.mubr.f32.mxu0 0.0
    %487 = vmatmul.mubr.f32.gmra.mrb[0].mxu0 %v407
    %v488 = vpop.f32.mrb[0].mxu0
    %v489 = vadd.f32 %v398, %v488
    %v490 = vpop.f32.mrb[0].mxu0
    %491 = vmatprep.mubr.f32.mxu0 0.0
    %492 = vmatmul.mubr.f32.gmra.mrb[0].mxu0 %v410
    %v493 = vpop.f32.mrb[0].mxu0
    %v494 = vadd.f32 %v398, %v493
    %v495 = vpop.f32.mrb[0].mxu0
    %496 = vdwg.mxu0
    %vm497 = vcmask 523264
    %v498 = vsel %vm497, %v479, 0.0
    %499 = vadd.xlane.f32.xlu0 %v498
    %v500 = vpop.xlane.xlu0 %499
    %v501 = vsel %vm497, %v484, 0.0
    %502 = vadd.xlane.f32.xlu0 %v501
    %v503 = vpop.xlane.xlu0 %502
    %v504 = vsel %vm497, %v489, 0.0
    %505 = vadd.xlane.f32.xlu0 %v504
    %v506 = vpop.xlane.xlu0 %505
    %v507 = vsel %vm497, %v494, 0.0
    %508 = vadd.xlane.f32.xlu0 %v507
    %v509 = vpop.xlane.xlu0 %508
    %v510 = vrcp.pop 64.0
    %v511 = vmul.f32 %v500, %v510
    %v512 = vmul.f32 %v503, %v510
    %v513 = vmul.f32 %v506, %v510
    %v514 = vmul.f32 %v509, %v510
    %v515 = vsub.f32 %v479, %v511
    %v516 = vsub.f32 %v484, %v512
    %v517 = vsub.f32 %v489, %v513
    %v518 = vsub.f32 %v494, %v514
    %v519 = vmul.f32 %v515, %v515
    %v520 = vmul.f32 %v516, %v516
    %v521 = vmul.f32 %v517, %v517
    %v522 = vmul.f32 %v518, %v518
    %v523 = vsel %vm497, %v519, 0.0
    %524 = vadd.xlane.f32.xlu0 %v523
    %v525 = vpop.xlane.xlu0 %524
    %v526 = vsel %vm497, %v520, 0.0
    %527 = vadd.xlane.f32.xlu0 %v526
    %v528 = vpop.xlane.xlu0 %527
    %v529 = vsel %vm497, %v521, 0.0
    %530 = vadd.xlane.f32.xlu0 %v529
    %v531 = vpop.xlane.xlu0 %530
    %v532 = vsel %vm497, %v522, 0.0
    %533 = vadd.xlane.f32.xlu0 %v532
    %v534 = vpop.xlane.xlu0 %533
    %v535 = vmul.f32 %v525, %v510
    %v536 = vmul.f32 %v528, %v510
    %v537 = vmul.f32 %v531, %v510
    %v538 = vmul.f32 %v534, %v510
    %v539 = vadd.f32 %v535, 1e-05
    %v540 = vadd.f32 %v536, 1e-05
    %v541 = vadd.f32 %v537, 1e-05
    %v542 = vadd.f32 %v538, 1e-05
    %v543 = vrsqrt.pop %v539
    %v544 = vrsqrt.pop %v540
    %v545 = vrsqrt.pop %v541
    %v546 = vrsqrt.pop %v542
    %v547 = vmul.f32 %v515, %v543
    %v548 = vmul.f32 %v516, %v544
    %v549 = vmul.f32 %v517, %v545
    %v550 = vmul.f32 %v518, %v546
    %v551 = vld [vmem:[%s5] sm:$0x1]
    %v553 = vlaneseq
    %v554 = vshrl.u32 %v553, 7
    %v555 = vsub.s32 0, %v554
    %v556 = vrot.slane %v551, %v555
    %v558 = vmul.f32 %v547, %v556
    %v559 = vmul.f32 %v548, %v556
    %v560 = vmul.f32 %v549, %v556
    %v561 = vmul.f32 %v550, %v556
    %v562 = vld [vmem:[%s6] sm:$0x1]
    %v564 = vlaneseq
    %v565 = vshrl.u32 %v564, 7
    %v566 = vsub.s32 0, %v565
    %v567 = vrot.slane %v562, %v566
    %v569 = vadd.f32 %v558, %v567
    %v570 = vadd.f32 %v559, %v567
    %v571 = vadd.f32 %v560, %v567
    %v572 = vadd.f32 %v561, %v567
    %v573 = vmax.f32 %v569, 0.0
    %v574 = vmax.f32 %v570, 0.0
    %v575 = vmax.f32 %v571, 0.0
    %v576 = vmax.f32 %v572, 0.0
    %v577 = vld [vmem:[%s7] sm:$0xff]
    %v578 = vld [vmem:[%s7 + $0x8] sm:$0xff]
    %v579 = vld [vmem:[%s7 + $0x10] sm:$0xff]
    %v580 = vld [vmem:[%s7 + $0x18] sm:$0xff]
    %v581 = vld [vmem:[%s7 + $0x20] sm:$0xff]
    %v582 = vld [vmem:[%s7 + $0x28] sm:$0xff]
    %v583 = vld [vmem:[%s7 + $0x30] sm:$0xff]
    %v584 = vld [vmem:[%s7 + $0x38] sm:$0xff]
    %v585 = vld [vmem:[%s8] sm:$0x1]
    %v587 = vlaneseq
    %v588 = vshrl.u32 %v587, 7
    %v589 = vsub.s32 0, %v588
    %v590 = vrot.slane %v585, %v589
    %v593 = vsel %vm497, %v573, 0
    %v596 = vsel %vm497, %v574, 0
    %v599 = vsel %vm497, %v575, 0
    %v602 = vsel %vm497, %v576, 0
    %604 = vmatprep.subr.mxu0 0.0
    %605 = vmatpush1.msra.mxu0 %v577
    %606 = vmatprep.subr.mxu0 0.0
    %607 = vmatpush1.msra.mxu0 %v578
    %608 = vmatprep.subr.mxu0 0.0
    %609 = vmatpush1.msra.mxu0 %v579
    %610 = vmatprep.subr.mxu0 0.0
    %611 = vmatpush1.msra.mxu0 %v580
    %612 = vmatprep.subr.mxu0 0.0
    %613 = vmatpush1.msra.mxu0 %v581
    %614 = vmatprep.subr.mxu0 0.0
    %615 = vmatpush1.msra.mxu0 %v582
    %616 = vmatprep.subr.mxu0 0.0
    %617 = vmatpush1.msra.mxu0 %v583
    %618 = vmatprep.subr.mxu0 0.0
    %619 = vmatpush1.msra.mxu0 %v584
    %620 = vmatprep.subr.mxu0 0.0
    %621 = vmatpush1.msra.mxu0 0.0
    %622 = vmatprep.subr.mxu0 0.0
    %623 = vmatpush1.msra.mxu0 0.0
    %624 = vmatprep.subr.mxu0 0.0
    %625 = vmatpush1.msra.mxu0 0.0
    %626 = vmatprep.subr.mxu0 0.0
    %627 = vmatpush1.msra.mxu0 0.0
    %628 = vmatprep.subr.mxu0 0.0
    %629 = vmatpush1.msra.mxu0 0.0
    %630 = vmatprep.subr.mxu0 0.0
    %631 = vmatpush1.msra.mxu0 0.0
    %632 = vmatprep.subr.mxu0 0.0
    %633 = vmatpush1.msra.mxu0 0.0
    %634 = vmatprep.subr.mxu0 0.0
    %635 = vmatpush1.msra.mxu0 0.0
    %636 = vmatprep.subr.mxu0 0.0
    %637 = vmatpush1.msra.mxu0 0.0
    %638 = vmatprep.subr.mxu0 0.0
    %639 = vmatpush1.msra.mxu0 0.0
    %640 = vmatprep.subr.mxu0 0.0
    %641 = vmatpush1.msra.mxu0 0.0
    %642 = vmatprep.subr.mxu0 0.0
    %643 = vmatpush1.msra.mxu0 0.0
    %644 = vmatprep.subr.mxu0 0.0
    %645 = vmatpush1.msra.mxu0 0.0
    %646 = vmatprep.subr.mxu0 0.0
    %647 = vmatpush1.msra.mxu0 0.0
    %648 = vmatprep.subr.mxu0 0.0
    %649 = vmatpush1.msra.mxu0 0.0
    %650 = vmatprep.subr.mxu0 0.0
    %651 = vmatpush1.msra.mxu0 0.0
    %652 = vmatprep.subr.mxu0 0.0
    %653 = vmatpush1.msra.mxu0 0.0
    %654 = vmatprep.subr.mxu0 0.0
    %655 = vmatpush1.msra.mxu0 0.0
    %656 = vmatprep.subr.mxu0 0.0
    %657 = vmatpush1.msra.mxu0 0.0
    %658 = vmatprep.subr.mxu0 0.0
    %659 = vmatpush1.msra.mxu0 0.0
    %660 = vmatprep.subr.mxu0 0.0
    %661 = vmatpush1.msra.mxu0 0.0
    %662 = vmatprep.subr.mxu0 0.0
    %663 = vmatpush1.msra.mxu0 0.0
    %664 = vmatprep.subr.mxu0 0.0
    %665 = vmatpush1.msra.mxu0 0.0
    %666 = vmatprep.subr.mxu0 0.0
    %667 = vmatpush1.msra.mxu0 0.0
    %668 = vmatprep.mubr.f32.mxu0 0.0
    %669 = vmatmul.mubr.f32.gmra.mrb[0].mxu0 %v593
    %v670 = vpop.f32.mrb[0].mxu0
    %v671 = vadd.f32 %v590, %v670
    %v672 = vpop.f32.mrb[0].mxu0
    %673 = vmatprep.mubr.f32.mxu0 0.0
    %674 = vmatmul.mubr.f32.gmra.mrb[0].mxu0 %v596
    %v675 = vpop.f32.mrb[0].mxu0
    %v676 = vadd.f32 %v590, %v675
    %v677 = vpop.f32.mrb[0].mxu0
    %678 = vmatprep.mubr.f32.mxu0 0.0
    %679 = vmatmul.mubr.f32.gmra.mrb[0].mxu0 %v599
    %v680 = vpop.f32.mrb[0].mxu0
    %v681 = vadd.f32 %v590, %v680
    %v682 = vpop.f32.mrb[0].mxu0
    %683 = vmatprep.mubr.f32.mxu0 0.0
    %684 = vmatmul.mubr.f32.gmra.mrb[0].mxu0 %v602
    %v685 = vpop.f32.mrb[0].mxu0
    %v686 = vadd.f32 %v590, %v685
    %v687 = vpop.f32.mrb[0].mxu0
    %688 = vdwg.mxu0
    %689 = vst.msk [vmem:[#allocation5] sm:$0xff] %vm63, %v671
    %690 = vst.msk [vmem:[#allocation5 + $0x8] sm:$0xff] %vm63, %v676
    %691 = vst.msk [vmem:[#allocation5 + $0x10] sm:$0xff] %vm63, %v681
    %692 = vst.msk [vmem:[#allocation5 + $0x18] sm:$0xff] %vm63, %v686
    // Predicated region
    $region42: #{tpu_custom_call.1} parent=1 // pred_check
      _
    $region43: #{tpu_custom_call.1} parent=1 // pred_check_branch
      %694 = sbr.rel (0) target = $region45
    $region44: #{tpu_custom_call.1} parent=1 // pred_region
      %s696 = ssub.s32 512, 512
      %697 = vsyncadd [#allocation4], %s696
      %s698 = sshll.u32 [#allocation5], 4
      %s699 = int_to_ptr.vmem [resolvable:$true] %s698
      %704 = dma.vmem_to_hbm [thread:$0]  %s699, 512, %s9, [#allocation4], 128, 128, 8
    $region45: #{tpu_custom_call.1} parent=1 // pred_fallthru
      _
    // Predicated region
    $region46: #{tpu_custom_call.1} parent=1 // pred_check
      _
    $region47: #{tpu_custom_call.1} parent=1 // pred_check_branch
      %706 = sbr.rel (0) target = $region49
    $region48: #{tpu_custom_call.1} parent=1 // pred_region
      %707 = dma.done [#allocation4], 512
    $region49: #{tpu_custom_call.1} parent=1 // pred_fallthru
      _
    %708 = vsyncpa [#allocation3], 1
    %709 = vsyncpa [#allocation4], 1

</llo_original>
